<compile_context>
chip_gen: v7x
topology: tpu7x:2x2x1
jax: 0.10.0
libtpu: 0.0.40
codegen_flags: <defaults>
</compile_context>

<pallas_src>
import functools

import jax
import jax.numpy as jnp
from jax.experimental import pallas as pl
from jax.experimental.pallas import tpu as pltpu


_LANE = 128            # lane width / MXU column quantum
_SUBLANE_BF16 = 16     # bf16 sublane packing quantum


def _round_up(x, m):
    return ((x + m - 1) // m) * m


@functools.lru_cache(maxsize=1)
def _vmem_budget_and_limit():
    """Generation-aware VMEM sizing.

    v5e / v6e: 128 MiB physical VMEM -> large working-set budget.
    v7x (64 MiB per TensorCore) or unknown chip -> stay conservative.
    Returns (working_set_budget_bytes, vmem_limit_bytes)."""
    try:
        cap = int(pltpu.get_tpu_info().vmem_capacity_bytes)
    except Exception:
        cap = 64 * 1024 * 1024
    if cap >= 100 * 1024 * 1024:                    # v5e / v6e
        return 80 * 1024 * 1024, 100 * 1024 * 1024
    return 36 * 1024 * 1024, 48 * 1024 * 1024       # v7x / unknown


def _adapt_kernel(x_ref, w_ref, b_ref, o_ref):
    # x_ref: (TM, Ds) f32 or bf16 | w_ref: (Ds, TN) bf16 | b_ref: (1, TN) bf16
    # o_ref: (TM, TN) bf16
    x = x_ref[...].astype(jnp.bfloat16)             # in-kernel cast (no-op if bf16)
    acc = jnp.dot(x, w_ref[...], preferred_element_type=jnp.float32)   # MXU, f32 acc
    o_ref[...] = (acc + b_ref[...].astype(jnp.float32)).astype(o_ref.dtype)


def _plan_tiles(M, Ds, Dt, x_itemsize, budget):
    """Choose (TM, TN, Dt_pad, n_tiles, m_tiles, w_resident).

    TN targets the full 128-padded out-feature width; shrink TN (floor 512)
    before TM (floor 256) when the double-buffered footprint exceeds `budget`;
    only as a last resort go below those floors.  Loop nesting is then picked
    so the operand with the larger total HBM cost stays resident in VMEM."""
    Dt_pad = _round_up(Dt, _LANE)
    TM_cap = _round_up(M, _SUBLANE_BF16)
    TM = min(512, TM_cap)
    TN = Dt_pad

    def footprint(tm, tn):
        # double-buffered x + W + b + out tiles
        return 2 * (tm * Ds * x_itemsize + Ds * tn * 2 + tn * 2 + tm * tn * 2)

    tn_floor = min(512, Dt_pad)
    while footprint(TM, TN) > budget and TN > tn_floor:
        TN = max(tn_floor, _round_up(TN // 2, _LANE))
    tm_floor = min(256, TM_cap)
    while footprint(TM, TN) > budget and TM > tm_floor:
        TM = max(tm_floor, _round_up(TM // 2, _SUBLANE_BF16))
    # Last resort (very large Ds): drop below the MXU-friendly floors rather
    # than exceeding VMEM.
    while footprint(TM, TN) > budget and TN > _LANE:
        TN = max(_LANE, _round_up(TN // 2, _LANE))
    while footprint(TM, TN) > budget and TM > _SUBLANE_BF16:
        TM = max(_SUBLANE_BF16, _round_up(TM // 2, _SUBLANE_BF16))

    Dt_pad = _round_up(Dt_pad, TN)          # every N tile full & lane-dense
    n_tiles = Dt_pad // TN
    m_tiles = pl.cdiv(M, TM)

    x_layer = M * Ds * x_itemsize           # per-layer x bytes
    w_layer = Ds * Dt_pad * 2               # per-layer W bytes (bf16)
    cost_w_resident = n_tiles * x_layer + w_layer    # grid (L, n, m), m innermost
    cost_x_resident = x_layer + m_tiles * w_layer    # grid (L, m, n), n innermost
    w_resident = cost_w_resident <= cost_x_resident
    return TM, TN, Dt_pad, n_tiles, m_tiles, w_resident


def multi_layer_adaptation_pallas(x_stack, w_stack, b_stack):
    """out[l] = x[l] @ w[l] + b[l]   (bf16 linear, f32 MXU accumulation).

    x_stack: [L, M, Ds] float32 or bfloat16 (cast to bf16 inside the kernel).
    w_stack: [L, Ds, Dt] bf16 (pre-transposed Linear weights).
    b_stack: [L, 1, Dt]  bf16.
    Returns [L, M, Dt] bf16."""
    L, M, Ds = x_stack.shape
    Dt = w_stack.shape[-1]
    x_itemsize = jnp.dtype(x_stack.dtype).itemsize

    budget, vmem_limit = _vmem_budget_and_limit()
    TM, TN, Dt_pad, n_tiles, m_tiles, w_resident = _plan_tiles(
        M, Ds, Dt, x_itemsize, budget)

    if Dt_pad != Dt:
        # Zero-pad out-features once (zero columns -> exact-zero output columns).
        w_stack = jnp.pad(w_stack, ((0, 0), (0, 0), (0, Dt_pad - Dt)))
        b_stack = jnp.pad(b_stack, ((0, 0), (0, 0), (0, Dt_pad - Dt)))

    if w_resident:
        # grid (L, n, m): W/b block index is constant across the innermost m
        # axis -> weights stay resident in VMEM; x streamed (read once when
        # n_tiles == 1, the common case).
        grid = (L, n_tiles, m_tiles)
        x_spec = pl.BlockSpec((pl.Squeezed(), TM, Ds), lambda l, n, m: (l, m, 0))
        w_spec = pl.BlockSpec((pl.Squeezed(), Ds, TN), lambda l, n, m: (l, 0, n))
        b_spec = pl.BlockSpec((pl.Squeezed(), 1, TN), lambda l, n, m: (l, 0, n))
        o_spec = pl.BlockSpec((pl.Squeezed(), TM, TN), lambda l, n, m: (l, m, n))
        x_reads, w_reads = n_tiles, 1
    else:
        # grid (L, m, n): x block index is constant across the innermost n axis
        # -> the (larger) x tile stays resident; W re-streamed per m tile.
        grid = (L, m_tiles, n_tiles)
        x_spec = pl.BlockSpec((pl.Squeezed(), TM, Ds), lambda l, m, n: (l, m, 0))
        w_spec = pl.BlockSpec((pl.Squeezed(), Ds, TN), lambda l, m, n: (l, 0, n))
        b_spec = pl.BlockSpec((pl.Squeezed(), 1, TN), lambda l, m, n: (l, 0, n))
        o_spec = pl.BlockSpec((pl.Squeezed(), TM, TN), lambda l, m, n: (l, m, n))
        x_reads, w_reads = 1, m_tiles

    grid_spec = pltpu.PrefetchScalarGridSpec(
        num_scalar_prefetch=0,
        grid=grid,
        in_specs=[x_spec, w_spec, b_spec],
        out_specs=o_spec,
    )

    # bytes_accessed reflects the actual streaming pattern (re-reads counted).
    cost = pl.CostEstimate(
        flops=2 * L * M * Ds * Dt_pad,
        transcendentals=0,
        bytes_accessed=L * (x_reads * M * Ds * x_itemsize
                            + w_reads * Ds * Dt_pad * 2
                            + w_reads * Dt_pad * 2
                            + M * Dt_pad * 2),
    )

    out = pl.pallas_call(
        _adapt_kernel,
        out_shape=jax.ShapeDtypeStruct((L, M, Dt_pad), jnp.bfloat16),
        grid_spec=grid_spec,
        compiler_params=pltpu.CompilerParams(
            # No grid axis carries a reduction (output block depends on every
            # axis), so all axes may be parallel (v7x megacore shards freely).
            dimension_semantics=("parallel", "parallel", "parallel"),
            vmem_limit_bytes=vmem_limit,
        ),
        cost_estimate=cost,
    )(x_stack, w_stack, b_stack)

    # Padded out-feature columns are exact zeros; trim lazily back to the
    # caller's width (XLA fuses the slice into the consumer when possible).
    return out[:, :, :Dt] if Dt_pad != Dt else out


class MultiLayerAdaptationLayerPallas:
    """JAX/Pallas port of MultiLayerAdaptationLayer."""

    def __init__(self, student_dim, teacher_dim, num_student_layers,
                 num_teacher_layers, key, dtype=jnp.bfloat16):
        self.student_dim = student_dim
        self.teacher_dim = teacher_dim
        self.num_student_layers = num_student_layers
        self.dtype = dtype
        self.layer_mapping = self.create_layer_mapping(
            num_student_layers, num_teacher_layers)

        # Deterministic init matching torch.nn.Linear parameter shapes:
        #   weight_i: [teacher_dim, student_dim], bias_i: [teacher_dim]
        bound = 1.0 / (student_dim ** 0.5)
        kw, kb = jax.random.split(key)
        weights = jax.random.uniform(
            kw, (num_student_layers, teacher_dim, student_dim),
            minval=-bound, maxval=bound, dtype=jnp.float32).astype(dtype)
        biases = jax.random.uniform(
            kb, (num_student_layers, teacher_dim),
            minval=-bound, maxval=bound, dtype=jnp.float32).astype(dtype)

        # Kernel layout: W^T stacked [L, Ds, Dt_pad128], bias [L, 1, Dt_pad128],
        # out-feature axis pre-padded ONCE to a multiple of 128 (lane-dense
        # output stores; padded zero columns dropped when returning the list).
        self.teacher_dim_padded = _round_up(teacher_dim, _LANE)
        pad_n = self.teacher_dim_padded - teacher_dim
        w_t = jnp.transpose(weights, (0, 2, 1))                  # [L, Ds, Dt]
        self.w_stack = jnp.pad(w_t, ((0, 0), (0, 0), (0, pad_n)))
        self.b_stack = jnp.pad(biases[:, None, :], ((0, 0), (0, 0), (0, pad_n)))

    @staticmethod
    def create_layer_mapping(num_student_layers, num_teacher_layers):
        return {i: round(i * (num_teacher_layers - 1) / (num_student_layers - 1))
                for i in range(num_student_layers)}

    def __call__(self, student_hidden_states):
        # Mirror the torch forward: process at most num_student_layers states.
        states = list(student_hidden_states)[: self.num_student_layers]
        L = len(states)
        batch, seq, _ = states[0].shape
        M = batch * seq

        # The list interface forces one concatenation; fuse the bf16 cast into
        # it so the intermediate is 2 B/elem.  Callers holding a contiguous
        # [L, M, Ds] tensor (f32 or bf16) should call
        # multi_layer_adaptation_pallas directly (bf16 cast happens in-kernel).
        x_stack = jnp.stack(
            [s.astype(self.dtype).reshape(M, self.student_dim) for s in states],
            axis=0)  # [L, M, Ds]

        out = multi_layer_adaptation_pallas(
            x_stack, self.w_stack[:L], self.b_stack[:L])  # [L, M, >=Dt]

        # Per-layer trim + reshape (single lazy slice fused with the reshape).
        return [out[i, :, : self.teacher_dim].reshape(batch, seq, self.teacher_dim)
                for i in range(L)]


if __name__ == "__main__":
    # Small, module-consistent shapes.
    batch, seq = 2, 8
    student_dim, teacher_dim = 32, 64
    num_student_layers, num_teacher_layers = 4, 6

    key = jax.random.PRNGKey(0)
    k_params, k_data = jax.random.split(key)

    module = MultiLayerAdaptationLayerPallas(
        student_dim, teacher_dim, num_student_layers, num_teacher_layers,
        key=k_params)

    # num_student_layers + 1 hidden states exercises the early-break semantics.
    data_keys = jax.random.split(k_data, num_student_layers + 1)
    student_hidden_states = [
        jax.random.normal(k, (batch, seq, student_dim), dtype=jnp.float32)
        for k in data_keys
    ]

    outs = module(student_hidden_states)
    outs = [jax.block_until_ready(o) for o in outs]
    assert len(outs) == num_student_layers

    # Reference check in plain JAX (bf16 linear, f32 accumulation).
    for i, (hs, o) in enumerate(zip(student_hidden_states, outs)):
        x = hs.astype(jnp.bfloat16).reshape(-1, student_dim)
        w = module.w_stack[i][:, :teacher_dim]
        b = module.b_stack[i][:, :teacher_dim]
        ref = (jnp.dot(x, w, preferred_element_type=jnp.float32)
               + b.astype(jnp.float32)).astype(jnp.bfloat16)
        assert o.shape == (batch, seq, teacher_dim), o.shape
        assert o.dtype == jnp.bfloat16, o.dtype
        assert jnp.allclose(o.reshape(-1, teacher_dim).astype(jnp.float32),
                            ref.astype(jnp.float32), atol=2e-2, rtol=2e-2), \
            f"mismatch at layer {i}"

    # Also exercise the zero-copy path: contiguous f32 [L, M, Ds] input, bf16
    # cast happens inside the kernel.
    x_f32 = jnp.stack(
        [s.reshape(-1, student_dim)
         for s in student_hidden_states[:num_student_layers]], axis=0)
    out_direct = jax.block_until_ready(
        multi_layer_adaptation_pallas(x_f32, module.w_stack, module.b_stack))
    out_direct = out_direct[..., :teacher_dim]
    stacked = jnp.stack([o.reshape(-1, teacher_dim) for o in outs], axis=0)
    assert jnp.allclose(out_direct.astype(jnp.float32),
                        stacked.astype(jnp.float32), atol=2e-2, rtol=2e-2)

    print("KERNEL_OK")
</pallas_src>

<mosaic_0001>
module attributes {stable_mosaic.version = 11 : i64} {
  func.func @_adapt_kernel(%arg0: i32, %arg1: i32, %arg2: i32, %arg3: memref<1x16x32xbf16, #tpu.memory_space<vmem>>, %arg4: memref<1x32x128xbf16, #tpu.memory_space<vmem>>, %arg5: memref<1x1x128xbf16, #tpu.memory_space<vmem>>, %arg6: memref<1x16x128xbf16, #tpu.memory_space<vmem>>) attributes {dimension_semantics = [#tpu.dimension_semantics<parallel>, #tpu.dimension_semantics<parallel>, #tpu.dimension_semantics<parallel>], iteration_bounds = array<i64: 4, 1, 1>, scalar_prefetch = 0 : i64, scratch_operands = 0 : i64, tpu.core_type = #tpu.core_type<tc>, window_params = [{transform_indices = @transform_0, window_bounds = array<i64: 1, 16, 32>}, {transform_indices = @transform_1, window_bounds = array<i64: 1, 32, 128>}, {transform_indices = @transform_2, window_bounds = array<i64: 1, 1, 128>}, {transform_indices = @transform_3, window_bounds = array<i64: 1, 16, 128>}]} {
    %c0 = arith.constant 0 : index
    %c0_0 = arith.constant 0 : index
    %c0_1 = arith.constant 0 : index
    %0 = vector.load %arg3[%c0, %c0_0, %c0_1] : memref<1x16x32xbf16, #tpu.memory_space<vmem>>, vector<1x16x32xbf16>
    %1 = vector.shape_cast %0 : vector<1x16x32xbf16> to vector<16x32xbf16>
    %c0_2 = arith.constant 0 : index
    %c0_3 = arith.constant 0 : index
    %c0_4 = arith.constant 0 : index
    %2 = vector.load %arg4[%c0_2, %c0_3, %c0_4] : memref<1x32x128xbf16, #tpu.memory_space<vmem>>, vector<1x32x128xbf16>
    %3 = vector.shape_cast %2 : vector<1x32x128xbf16> to vector<32x128xbf16>
    %cst = arith.constant dense<0.000000e+00> : vector<16x128xf32>
    %4 = tpu.matmul %1, %3, %cst {dimension_numbers = #tpu.dot_dimension_numbers<[1], [0], [0], [1], [0, 0, 1, 1], [], []>} : vector<16x32xbf16>, vector<32x128xbf16>, vector<16x128xf32> -> vector<16x128xf32>
    %c0_5 = arith.constant 0 : index
    %c0_6 = arith.constant 0 : index
    %c0_7 = arith.constant 0 : index
    %5 = vector.load %arg5[%c0_5, %c0_6, %c0_7] : memref<1x1x128xbf16, #tpu.memory_space<vmem>>, vector<1x1x128xbf16>
    %6 = vector.shape_cast %5 : vector<1x1x128xbf16> to vector<1x128xbf16>
    %7 = arith.extf %6 : vector<1x128xbf16> to vector<1x128xf32>
    %8 = vector.broadcast %7 : vector<1x128xf32> to vector<16x128xf32>
    %9 = arith.addf %4, %8 : vector<16x128xf32>
    %10 = arith.truncf %9 : vector<16x128xf32> to vector<16x128xbf16>
    %c0_8 = arith.constant 0 : index
    %c0_9 = arith.constant 0 : index
    %c0_10 = arith.constant 0 : index
    %11 = vector.load %arg6[%c0_8, %c0_9, %c0_10] : memref<1x16x128xbf16, #tpu.memory_space<vmem>>, vector<1x16x128xbf16>
    %12 = vector.shape_cast %11 : vector<1x16x128xbf16> to vector<16x128xbf16>
    %13 = vector.shape_cast %10 : vector<16x128xbf16> to vector<1x16x128xbf16>
    tpu.vector_store %arg6[%c0_8, %c0_9, %c0_10], %13 {strides = array<i32>} : memref<1x16x128xbf16, #tpu.memory_space<vmem>>, vector<1x16x128xbf16>,
    return
  }
  func.func @transform_0(%arg0: i32, %arg1: i32, %arg2: i32) -> (i32, i32, i32) {
    %c0_i32 = arith.constant 0 : i32
    %c0_i32_0 = arith.constant 0 : i32
    return %arg0, %arg2, %c0_i32 : i32, i32, i32
  }
  func.func @transform_1(%arg0: i32, %arg1: i32, %arg2: i32) -> (i32, i32, i32) {
    %c0_i32 = arith.constant 0 : i32
    %c0_i32_0 = arith.constant 0 : i32
    return %arg0, %c0_i32, %arg1 : i32, i32, i32
  }
  func.func @transform_2(%arg0: i32, %arg1: i32, %arg2: i32) -> (i32, i32, i32) {
    %c0_i32 = arith.constant 0 : i32
    %c0_i32_0 = arith.constant 0 : i32
    return %arg0, %c0_i32, %arg1 : i32, i32, i32
  }
  func.func @transform_3(%arg0: i32, %arg1: i32, %arg2: i32) -> (i32, i32, i32) {
    %c0_i32 = arith.constant 0 : i32
    return %arg0, %arg2, %arg1 : i32, i32, i32
  }
}

</mosaic_0001>

<llo_original>
// kernel: tpu_custom_call.1
$region0: #{tpu_custom_call.1}
  #allocation0 [shape = 'u32[]', space=smem, size = 0x4, offset = 0x4, fixed_abs, tag = 'smem constant byte address 0x4 - core index']
  #allocation1 [shape = 'u32[144,128]{1,0:T(1,128)}', space=vmem, size = 0x12000, scoped, tag = 'internal scratch']
  %s0 = inlined_call_operand.hbm [shape: bf16[4,16,32], index: 0, kind: input, shape index: {}]
  %s1 = inlined_call_operand.hbm [shape: bf16[4,32,128], index: 1, kind: input, shape index: {}]
  %s2 = inlined_call_operand.vmem [shape: bf16[4,1,128], index: 2, kind: input, shape index: {}]
  %s3 = inlined_call_operand.hbm [shape: bf16[4,16,128], index: 3, kind: output, shape index: {}]
  %s4 = sld [smem:[#allocation0]]
  $region53: #{tpu_custom_call.1} parent=0
    _
  %s6 = ssub.s32 1, %s4
  %s7 = scalar_select 0, %s6, %s4
  $region1: #{tpu_custom_call.1} parent=0
    #allocation2 [shape = 'u8[8192]{0}', space=vmem, size = 0x2000, scoped, tag = 'input window, operand 0']
    #allocation3 [shape = 's32[2]{0}', space=sflag, size = 0x8, scoped, tag = 'scoped memory for tpu_custom_call.1']
    #allocation4 [shape = 's32[2]{0}', space=sflag, size = 0x8, scoped, tag = 'scoped memory for tpu_custom_call.1']
    #allocation5 [shape = 'u8[16384]{0}', space=vmem, size = 0x4000, scoped, tag = 'input window, operand 1']
    #allocation6 [shape = 's32[2]{0}', space=sflag, size = 0x8, scoped, tag = 'scoped memory for tpu_custom_call.1']
    #allocation7 [shape = 'u8[8192]{0}', space=vmem, size = 0x2000, scoped, tag = 'output window, operand 0']
    %8 = vsyncpa [#allocation3], 0
    %s9 = scalar_lea.sflag [#allocation3], 1
    %10 = vsyncpa %s9, 0
    %11 = vsyncpa [#allocation6], 0
    %s12 = scalar_lea.sflag [#allocation6], 1
    %13 = vsyncpa %s12, 0
    %14 = vsyncpa [#allocation4], 0
    %s15 = scalar_lea.sflag [#allocation4], 1
    %16 = vsyncpa %s15, 0
    loop: start=0, step=1, limit=6
    $region2: #{tpu_custom_call.1} parent=1 // loop_pre_header
      _
    $region3: #{tpu_custom_call.1} parent=1 // loop_header
      %s18 = sphi 0, %s22
      %p19 = scmp.ge.s32.totalorder %s18, 6
      %s25 = sphi 0, %s44
      %s26 = sphi 0, %s40
      %s27 = sphi 0, %s36
      %s28 = sphi 0, %s25
      %s29 = sphi 0, %s26
      %s30 = sphi 0, %s27
      %s31 = sphi 0, %s28
      %s32 = sphi 0, %s29
      %s33 = sphi 0, %s30
      %s49 = sphi 0, %s51
      %s52 = sphi 0, %s49
      %s53 = sphi 0, %s52
      %s69 = sphi 0, %s53
      %s77 = sphi 0, %s79
      %s80 = sphi 0, %s77
      %s81 = sphi 0, %s80
      %s97 = sphi 0, %s81
      %s105 = sphi 0, %s107
      %s108 = sphi 0, %s105
      %s109 = sphi 0, %s108
      %s125 = sphi 0, %s109
      %s135 = sphi 0, %s137
      %s138 = sphi 0, %s135
      %s139 = sphi 0, %s138
      %s155 = sphi 0, %s139
    $region4: #{tpu_custom_call.1} parent=1 // loop_header_branch
      %21 = sbr.rel (%p19) target = $region8
    $region5: #{tpu_custom_call.1} parent=1 // loop_body
      %s23 = ssub.s32 %s18, 1
      %s24 = ssub.s32 %s18, 2
      %s34 = sadd.s32 1, %s27
      %p35 = scmp.ge.s32.totalorder %s34, 1
      %s36 = scalar_select %p35, 0, %s34
      %s37 = sadd.s32 1, %s26
      %s38 = scalar_select %p35, %s37, %s26
      %p39 = scmp.ge.s32.totalorder %s38, 1
      %s40 = scalar_select %p39, 0, %s38
      %s41 = sadd.s32 1, %s25
      %s42 = scalar_select %p39, %s41, %s25
      %p43 = scmp.ge.s32.totalorder %s42, 4
      %s44 = scalar_select %p43, 0, %s42
      %s45 = ssub.s32 %s25, %s44
      %s46 = ssub.s32 %s27, %s36
      %s47 = sor.u32 %s45, %s46
      %p48 = scmp.eq.s32.totalorder %s47, 0
      %s50 = sadd.s32 %s49, 1
      %s51 = scalar_select %p48, %s49, %s50
      %p54 = pneg %p48
      %p55 = scmp.eq.s32.totalorder %s18, 3
      %p56 = por %p54, %p55
      %p57 = scmp.ne.s32.totalorder %s49, %s52
      %p58 = scmp.eq.s32.totalorder %s18, 0
      %p59 = por %p57, %p58
      %p60 = scmp.ne.s32.totalorder %s49, %s52
      %p61 = scmp.eq.s32.totalorder %s23, 3
      %p62 = por %p60, %p61
      %p63 = scmp.ne.s32.totalorder %s52, %s53
      %p64 = scmp.eq.s32.totalorder %s23, 0
      %p65 = por %p63, %p64
      %p66 = scmp.ne.s32.totalorder %s52, %s53
      %p67 = scmp.eq.s32.totalorder %s24, 3
      %p68 = por %p66, %p67
      %p70 = scmp.ne.s32.totalorder %s53, %s69
      %p71 = scmp.eq.s32.totalorder %s24, 0
      %p72 = por %p70, %p71
      %s73 = ssub.s32 %s25, %s44
      %s74 = ssub.s32 %s26, %s40
      %s75 = sor.u32 %s73, %s74
      %p76 = scmp.eq.s32.totalorder %s75, 0
      %s78 = sadd.s32 %s77, 1
      %s79 = scalar_select %p76, %s77, %s78
      %p82 = pneg %p76
      %p83 = scmp.eq.s32.totalorder %s18, 3
      %p84 = por %p82, %p83
      %p85 = scmp.ne.s32.totalorder %s77, %s80
      %p86 = scmp.eq.s32.totalorder %s18, 0
      %p87 = por %p85, %p86
      %p88 = scmp.ne.s32.totalorder %s77, %s80
      %p89 = scmp.eq.s32.totalorder %s23, 3
      %p90 = por %p88, %p89
      %p91 = scmp.ne.s32.totalorder %s80, %s81
      %p92 = scmp.eq.s32.totalorder %s23, 0
      %p93 = por %p91, %p92
      %p94 = scmp.ne.s32.totalorder %s80, %s81
      %p95 = scmp.eq.s32.totalorder %s24, 3
      %p96 = por %p94, %p95
      %p98 = scmp.ne.s32.totalorder %s81, %s97
      %p99 = scmp.eq.s32.totalorder %s24, 0
      %p100 = por %p98, %p99
      %s101 = ssub.s32 %s25, %s44
      %s102 = ssub.s32 %s26, %s40
      %s103 = sor.u32 %s101, %s102
      %p104 = scmp.eq.s32.totalorder %s103, 0
      %s106 = sadd.s32 %s105, 1
      %s107 = scalar_select %p104, %s105, %s106
      %p110 = pneg %p104
      %p111 = scmp.eq.s32.totalorder %s18, 3
      %p112 = por %p110, %p111
      %p113 = scmp.ne.s32.totalorder %s105, %s108
      %p114 = scmp.eq.s32.totalorder %s18, 0
      %p115 = por %p113, %p114
      %p116 = scmp.ne.s32.totalorder %s105, %s108
      %p117 = scmp.eq.s32.totalorder %s23, 3
      %p118 = por %p116, %p117
      %p119 = scmp.ne.s32.totalorder %s108, %s109
      %p120 = scmp.eq.s32.totalorder %s23, 0
      %p121 = por %p119, %p120
      %p122 = scmp.ne.s32.totalorder %s108, %s109
      %p123 = scmp.eq.s32.totalorder %s24, 3
      %p124 = por %p122, %p123
      %p126 = scmp.ne.s32.totalorder %s109, %s125
      %p127 = scmp.eq.s32.totalorder %s24, 0
      %p128 = por %p126, %p127
      %s129 = ssub.s32 %s25, %s44
      %s130 = ssub.s32 %s27, %s36
      %s131 = sor.u32 %s129, %s130
      %s132 = ssub.s32 %s26, %s40
      %s133 = sor.u32 %s131, %s132
      %p134 = scmp.eq.s32.totalorder %s133, 0
      %s136 = sadd.s32 %s135, 1
      %s137 = scalar_select %p134, %s135, %s136
      %p140 = pneg %p134
      %p141 = scmp.eq.s32.totalorder %s18, 3
      %p142 = por %p140, %p141
      %p143 = scmp.ne.s32.totalorder %s135, %s138
      %p144 = scmp.eq.s32.totalorder %s18, 0
      %p145 = por %p143, %p144
      %p146 = scmp.ne.s32.totalorder %s135, %s138
      %p147 = scmp.eq.s32.totalorder %s23, 3
      %p148 = por %p146, %p147
      %p149 = scmp.ne.s32.totalorder %s138, %s139
      %p150 = scmp.eq.s32.totalorder %s23, 0
      %p151 = por %p149, %p150
      %p152 = scmp.ne.s32.totalorder %s138, %s139
      %p153 = scmp.eq.s32.totalorder %s24, 3
      %p154 = por %p152, %p153
      %p156 = scmp.ne.s32.totalorder %s139, %s155
      %p157 = scmp.eq.s32.totalorder %s24, 0
      %p158 = por %p156, %p157
      %p159 = scmp.le.s32.totalorder 1, %s18
      %p160 = scmp.lt.s32.totalorder %s18, 5
      %p161 = pnand %p159, %p160
      %p162 = pneg %p161
      // Predicated region
      $region9: #{tpu_custom_call.1} parent=5 // pred_check
        _
      $region10: #{tpu_custom_call.1} parent=5 // pred_check_branch
        %164 = sbr.rel (%p161) target = $region12
      $region11: #{tpu_custom_call.1} parent=5 // pred_region
        %s165 = ssub.s32 %s18, 1
      $region12: #{tpu_custom_call.1} parent=5 // pred_fallthru
        _
      %p166 = scmp.lt.s32.totalorder %s18, 4
      // Predicated region
      $region13: #{tpu_custom_call.1} parent=5 // pred_check
        %p167 = pneg %p166
      $region14: #{tpu_custom_call.1} parent=5 // pred_check_branch
        %169 = sbr.rel (%p167) target = $region16
      $region15: #{tpu_custom_call.1} parent=5 // pred_region
        // Predicated region
        $region17: #{tpu_custom_call.1} parent=15 // pred_check
          %p170 = pneg %p59
        $region18: #{tpu_custom_call.1} parent=15 // pred_check_branch
          %172 = sbr.rel (%p170) target = $region20
        $region19: #{tpu_custom_call.1} parent=15 // pred_region
          %s173 = sand.u32 %s49, 1
          %s174 = scalar_lea.sflag [#allocation3], %s173
          %s175 = sand.u32 %s49, 1
          %s176 = smul.addr %s175, 8
          %s177 = scalar_lea.vmem [#allocation2], %s176
          %s178 = smul.u32 2, %s27
          %s180 = ssub.s32 128, 128
          %181 = vsyncadd %s174, %s180
          %s182 = smul.addr %s25, 2
          %s183 = sadd.s32 %s178, %s182
          %s184 = smul.addr %s183, 64
          %s185 = scalar_lea.hbm %s0, %s184
          %s186 = sshll.u32 %s177, 4
          %s187 = int_to_ptr.vmem [resolvable:$true] %s186
          %192 = dma.hbm_to_vmem [thread:$0]  %s185, 128, %s187, %s174, 64, 64, 4
        $region20: #{tpu_custom_call.1} parent=15 // pred_fallthru
          _
        // Predicated region
        $region21: #{tpu_custom_call.1} parent=15 // pred_check
          %p193 = pneg %p87
        $region22: #{tpu_custom_call.1} parent=15 // pred_check_branch
          %195 = sbr.rel (%p193) target = $region24
        $region23: #{tpu_custom_call.1} parent=15 // pred_region
          %s196 = sand.u32 %s77, 1
          %s197 = scalar_lea.sflag [#allocation6], %s196
          %s198 = sand.u32 %s77, 1
          %s199 = smul.addr %s198, 16
          %s200 = scalar_lea.vmem [#allocation5], %s199
          %s202 = ssub.s32 256, 256
          %203 = vsyncadd %s197, %s202
          %s204 = smul.addr %s25, 4
          %s205 = sadd.s32 %s26, %s204
          %s206 = smul.addr %s205, 64
          %s207 = scalar_lea.hbm %s1, %s206
          %s208 = sshll.u32 %s200, 4
          %s209 = int_to_ptr.vmem [resolvable:$true] %s208
          %214 = dma.hbm_to_vmem [thread:$0]  %s207, 256, %s209, %s197, 64, 64, 4
        $region24: #{tpu_custom_call.1} parent=15 // pred_fallthru
          _
        // Predicated region
        $region25: #{tpu_custom_call.1} parent=15 // pred_check
          %p215 = pneg %p115
        $region26: #{tpu_custom_call.1} parent=15 // pred_check_branch
          %217 = sbr.rel (%p215) target = $region28
        $region27: #{tpu_custom_call.1} parent=15 // pred_region
          %p218 = scmp.lt.s32.totalorder %s25, 3
          %s219 = scalar_select %p218, %s25, 3
          %p220 = scmp.lt.s32.totalorder %s26, 0
          %s221 = scalar_select %p220, %s26, 0
          %s222 = sadd.s32 %s221, %s219
          %s223 = scalar_lea.vmem %s2, %s222
        $region28: #{tpu_custom_call.1} parent=15 // pred_fallthru
          _
      $region16: #{tpu_custom_call.1} parent=5 // pred_fallthru
        _
      %p224 = scmp.le.s32.totalorder 1, %s18
      %p225 = scmp.lt.s32.totalorder %s18, 5
      %p226 = pnand %p224, %p225
      %p227 = pneg %p226
      // Predicated region
      $region29: #{tpu_custom_call.1} parent=5 // pred_check
        _
      $region30: #{tpu_custom_call.1} parent=5 // pred_check_branch
        %229 = sbr.rel (%p226) target = $region32
      $region31: #{tpu_custom_call.1} parent=5 // pred_region
        %s230 = ssub.s32 %s18, 1
        %s231 = sand.u32 %s52, 1
        %s232 = scalar_lea.sflag [#allocation3], %s231
        %s233 = sand.u32 %s52, 1
        %s234 = smul.addr %s233, 8
        %s235 = scalar_lea.vmem [#allocation2], %s234
        // Predicated region
        $region33: #{tpu_custom_call.1} parent=31 // pred_check
          %p236 = pneg %p65
        $region34: #{tpu_custom_call.1} parent=31 // pred_check_branch
          %238 = sbr.rel (%p236) target = $region36
        $region35: #{tpu_custom_call.1} parent=31 // pred_region
          %239 = dma.done %s232, 128
        $region36: #{tpu_custom_call.1} parent=31 // pred_fallthru
          _
        %s240 = sand.u32 %s80, 1
        %s241 = scalar_lea.sflag [#allocation6], %s240
        %s242 = sand.u32 %s80, 1
        %s243 = smul.addr %s242, 16
        %s244 = scalar_lea.vmem [#allocation5], %s243
        // Predicated region
        $region37: #{tpu_custom_call.1} parent=31 // pred_check
          %p245 = pneg %p93
        $region38: #{tpu_custom_call.1} parent=31 // pred_check_branch
          %247 = sbr.rel (%p245) target = $region40
        $region39: #{tpu_custom_call.1} parent=31 // pred_region
          %248 = dma.done %s241, 256
        $region40: #{tpu_custom_call.1} parent=31 // pred_fallthru
          _
        %s249 = sand.u32 %s52, 1
        %s250 = scalar_lea.sflag [#allocation3], %s249
        %s251 = sand.u32 %s52, 1
        %s252 = smul.addr %s251, 8
        %s253 = scalar_lea.vmem [#allocation2], %s252
        %p254 = pneg %p65
        %p255 = pneg %p62
        %s256 = sand.u32 %s80, 1
        %s257 = scalar_lea.sflag [#allocation6], %s256
        %s258 = sand.u32 %s80, 1
        %s259 = smul.addr %s258, 16
        %s260 = scalar_lea.vmem [#allocation5], %s259
        %p261 = pneg %p93
        %p262 = pneg %p90
        %p263 = scmp.lt.s32.totalorder %s28, 3
        %s264 = scalar_select %p263, %s28, 3
        %p265 = scmp.lt.s32.totalorder %s29, 0
        %s266 = scalar_select %p265, %s29, 0
        %s267 = sadd.s32 %s266, %s264
        %s268 = scalar_lea.vmem %s2, %s267
        %p269 = pneg %p121
        %p270 = pneg %p118
        %p271 = pneg %p151
        %p272 = pneg %p148
        %s273 = sand.u32 %s138, 1
        %s274 = scalar_lea.sflag [#allocation4], %s273
        %s275 = sand.u32 %s138, 1
        %s276 = smul.addr %s275, 8
        %s277 = scalar_lea.vmem [#allocation7], %s276
        %s278 = smul.u32 2, %s30
        %p279 = scmp.lt.s32.totalorder %s28, 3
        %s280 = scalar_select %p279, %s28, 3
        %p281 = scmp.lt.s32.totalorder %s29, 0
        %s282 = scalar_select %p281, %s29, 0
        %s283 = sadd.s32 %s282, %s280
        %s284 = scalar_lea.vmem %s2, %s283
        %s285 = smul.u32 2, %s30
        %v287 = vld [vmem:[%s235] sm:$0xf]
        %v288 = vld [vmem:[%s235 + $0x4] sm:$0xf]
        %v289 = vld [vmem:[%s244] sm:$0xf]
        %v290 = vld [vmem:[%s244 + $0x4] sm:$0xf]
        %v291 = vld [vmem:[%s244 + $0x8] sm:$0xf]
        %v292 = vld [vmem:[%s244 + $0xc] sm:$0xf]
        %v293 = vld [vmem:[%s284] sm:$0x1]
        %v294 = vunpack.c.l.bf16 %v293
        %v295 = vlaneseq
        %v296 = vshrl.u32 %v295, 7
        %v297 = vsub.s32 0, %v296
        %v298 = vrot.slane %v294, %v297
        %v301 = vunpack.c.l.b16 %v287
        %v302 = vunpack.c.l.b16 %v288
        %v303 = vpack.c.b16 %v302, %v301
        %v308 = vunpack.c.l.b16 %v289
        %v309 = vunpack.c.l.b16 %v290
        %v310 = vunpack.c.l.b16 %v291
        %v311 = vunpack.c.l.b16 %v292
        %v312 = vpack.c.b16 %v309, %v308
        %v313 = vpack.c.b16 %v311, %v310
        %vm316 = vcmask 261120
        %v318 = vsel %vm316, %v303, 0
        %320 = vmatprep.subr.bf16.mxu0 0
        %321 = vmatpush1.bf16.msra.mxu0 %v312
        %322 = vmatprep.subr.bf16.mxu0 0
        %323 = vmatpush1.bf16.msra.mxu0 %v313
        %324 = vmatprep.subr.bf16.mxu0 0
        %325 = vmatpush1.bf16.msra.mxu0 0
        %326 = vmatprep.subr.bf16.mxu0 0
        %327 = vmatpush1.bf16.msra.mxu0 0
        %328 = vmatprep.subr.bf16.mxu0 0
        %329 = vmatpush1.bf16.msra.mxu0 0
        %330 = vmatprep.subr.bf16.mxu0 0
        %331 = vmatpush1.bf16.msra.mxu0 0
        %332 = vmatprep.subr.bf16.mxu0 0
        %333 = vmatpush1.bf16.msra.mxu0 0
        %334 = vmatprep.subr.bf16.mxu0 0
        %335 = vmatpush1.bf16.msra.mxu0 0
        %336 = vmatprep.subr.bf16.mxu0 0
        %337 = vmatpush1.bf16.msra.mxu0 0
        %338 = vmatprep.subr.bf16.mxu0 0
        %339 = vmatpush1.bf16.msra.mxu0 0
        %340 = vmatprep.subr.bf16.mxu0 0
        %341 = vmatpush1.bf16.msra.mxu0 0
        %342 = vmatprep.subr.bf16.mxu0 0
        %343 = vmatpush1.bf16.msra.mxu0 0
        %344 = vmatprep.subr.bf16.mxu0 0
        %345 = vmatpush1.bf16.msra.mxu0 0
        %346 = vmatprep.subr.bf16.mxu0 0
        %347 = vmatpush1.bf16.msra.mxu0 0
        %348 = vmatprep.subr.bf16.mxu0 0
        %349 = vmatpush1.bf16.msra.mxu0 0
        %350 = vmatprep.subr.bf16.mxu0 0
        %351 = vmatpush1.bf16.msra.mxu0 0
        %352 = vmatprep.mubr.bf16.mxu0 0
        %353 = vmatmul.mubr.bf16.gmra.mrb[0].mxu0 %v318
        %v354 = vpop.f32.mrb[0].mxu0
        %v355 = vadd.f32 %v298, %v354
        %v356 = vpop.f32.mrb[0].mxu0
        %v357 = vpop.f32.mrb[0].mxu0
        %v358 = vadd.f32 %v298, %v357
        %v359 = vpop.f32.mrb[0].mxu0
        %360 = vdwg.mxu0
        %v361 = vpack.c.bf16 %v358, %v355
        %v363 = vunpack.c.l.b16 %v361
        %v364 = vunpack.c.h.b16 %v361
        %v365 = vpack.c.b16 %v363, %v363
        %v366 = vpack.c.b16 %v364, %v364
        %369 = vst [vmem:[%s277] sm:$0xf] %v365
        %370 = vst [vmem:[%s277 + $0x4] sm:$0xf] %v366
        %s371 = sand.u32 %s138, 1
        %s372 = scalar_lea.sflag [#allocation4], %s371
        %s373 = sand.u32 %s138, 1
        %s374 = smul.addr %s373, 8
        %s375 = scalar_lea.vmem [#allocation7], %s374
        // Predicated region
        $region41: #{tpu_custom_call.1} parent=31 // pred_check
          %p376 = pneg %p148
        $region42: #{tpu_custom_call.1} parent=31 // pred_check_branch
          %378 = sbr.rel (%p376) target = $region44
        $region43: #{tpu_custom_call.1} parent=31 // pred_region
          %s379 = smul.u32 2, %s30
          %s381 = ssub.s32 128, 128
          %382 = vsyncadd %s372, %s381
          %s383 = sadd.s32 %s29, %s379
          %s384 = smul.addr %s28, 2
          %s385 = sadd.s32 %s383, %s384
          %s386 = smul.addr %s385, 64
          %s387 = scalar_lea.hbm %s3, %s386
          %s388 = sshll.u32 %s375, 4
          %s389 = int_to_ptr.vmem [resolvable:$true] %s388
          %394 = dma.vmem_to_hbm [thread:$0]  %s389, 128, %s387, %s372, 64, 64, 4
        $region44: #{tpu_custom_call.1} parent=31 // pred_fallthru
          _
      $region32: #{tpu_custom_call.1} parent=5 // pred_fallthru
        _
      %p395 = scmp.le.s32.totalorder 2, %s18
      // Predicated region
      $region45: #{tpu_custom_call.1} parent=5 // pred_check
        %p396 = pneg %p395
      $region46: #{tpu_custom_call.1} parent=5 // pred_check_branch
        %398 = sbr.rel (%p396) target = $region48
      $region47: #{tpu_custom_call.1} parent=5 // pred_region
        %s399 = ssub.s32 %s18, 2
        // Predicated region
        $region49: #{tpu_custom_call.1} parent=47 // pred_check
          %p400 = pneg %p154
        $region50: #{tpu_custom_call.1} parent=47 // pred_check_branch
          %402 = sbr.rel (%p400) target = $region52
        $region51: #{tpu_custom_call.1} parent=47 // pred_region
          %s403 = sand.u32 %s139, 1
          %s404 = scalar_lea.sflag [#allocation4], %s403
          %s405 = sand.u32 %s139, 1
          %s406 = smul.addr %s405, 8
          %s407 = scalar_lea.vmem [#allocation7], %s406
          %408 = dma.done %s404, 128
        $region52: #{tpu_custom_call.1} parent=47 // pred_fallthru
          _
      $region48: #{tpu_custom_call.1} parent=5 // pred_fallthru
        _
    $region6: #{tpu_custom_call.1} parent=1 // loop_footer
      %s22 = sadd.s32 1, %s18
    $region7: #{tpu_custom_call.1} parent=1 // loop_footer_branch
      %17 = sbr.rel target = $region3
    $region8: #{tpu_custom_call.1} parent=1 // loop_exit
      _
    %409 = vsyncpa [#allocation3], 1
    %s410 = scalar_lea.sflag [#allocation3], 1
    %411 = vsyncpa %s410, 1
    %412 = vsyncpa [#allocation6], 1
    %s413 = scalar_lea.sflag [#allocation6], 1
    %414 = vsyncpa %s413, 1
    %415 = vsyncpa [#allocation4], 1
    %s416 = scalar_lea.sflag [#allocation4], 1
    %417 = vsyncpa %s416, 1

</llo_original>
